<compile_context>
chip_gen: v6e
topology: v6e:2x2x1
jax: 0.10.0
libtpu: 0.0.40
codegen_flags: <defaults>
</compile_context>

<pallas_src>
import numpy as np
import jax
import jax.numpy as jnp
from jax.experimental import pallas as pl
from jax.experimental.pallas import tpu as pltpu


# ----------------------------------------------------------------------------
# Kernels
# ----------------------------------------------------------------------------
def _embed_kernel(feat_ref, pos_ref, win_ref, bin_ref, omega_ref, phase_ref, h_ref):
    # input_proj on the MXU
    x = jnp.dot(feat_ref[...], win_ref[...], preferred_element_type=jnp.float32)
    x = x + bin_ref[...]
    # ContinuousSincosEmbed angles: pos @ omega as `ndim` broadcast FMAs on the
    # VPU (a K=3 MXU matmul is pure latency).
    pos = pos_ref[...]
    omega = omega_ref[...]
    ang = jnp.zeros_like(x)
    for d in range(pos.shape[1]):                      # static ndim
        ang = ang + pos[:, d:d + 1] * omega[d:d + 1, :]
    # cos(a) == sin(a + pi/2): single transcendental per element (EUP slot).
    h_ref[...] = x + jnp.sin(ang + phase_ref[...])


def _message_pool_kernel(src_ref, dst_ref, mask_ref, invcnt_ref,
                         w1s_ref, w1d_ref, b1_ref, w2_ref, b2_ref, out_ref):
    deg, ts, hp = src_ref.shape
    # layer 1: concat([src, dst]) @ W1 == src @ W1[:H] + dst @ W1[H:]
    # src term per edge (edge-major layout -> layout-preserving reshape)
    h1s = jnp.dot(src_ref[...].reshape(deg * ts, hp), w1s_ref[...],
                  preferred_element_type=jnp.float32).reshape(deg, ts, hp)
    # dst term computed ONCE per supernode and broadcast along the degree axis
    dterm = jnp.dot(dst_ref[...], w1d_ref[...],
                    preferred_element_type=jnp.float32) + b1_ref[...]
    g = jax.nn.gelu(h1s + dterm[None, :, :], approximate=False)  # exact erf GELU
    # masked segment mean over the leading degree axis (VPU reduce, no MXU)
    g_mean = jnp.sum(g * mask_ref[...], axis=0) * invcnt_ref[...]
    # layer 2 commutes with the (linear) masked mean: mean(gelu) @ W2 + b2
    out_ref[...] = (jnp.dot(g_mean.astype(w2_ref.dtype), w2_ref[...],
                            preferred_element_type=jnp.float32) + b2_ref[...])


# ----------------------------------------------------------------------------
# pallas_call wrappers
# ----------------------------------------------------------------------------
def node_embed(feat, pos, w_in, b_in, omega, phase, *, tile_n):
    n, f = feat.shape
    ndim = pos.shape[1]
    hp = w_in.shape[1]
    assert n % tile_n == 0 and hp % 128 == 0
    return pl.pallas_call(
        _embed_kernel,
        out_shape=jax.ShapeDtypeStruct((n, hp), jnp.float32),
        grid=(n // tile_n,),
        in_specs=[
            pl.BlockSpec((tile_n, f), lambda i: (i, 0)),
            pl.BlockSpec((tile_n, ndim), lambda i: (i, 0)),
            pl.BlockSpec((f, hp), lambda i: (0, 0)),
            pl.BlockSpec((1, hp), lambda i: (0, 0)),
            pl.BlockSpec((ndim, hp), lambda i: (0, 0)),
            pl.BlockSpec((1, hp), lambda i: (0, 0)),
        ],
        out_specs=pl.BlockSpec((tile_n, hp), lambda i: (i, 0)),
        compiler_params=pltpu.CompilerParams(
            dimension_semantics=("parallel",),
            vmem_limit_bytes=48 * 1024 * 1024),
    )(feat, pos, w_in, b_in, omega, phase)


def message_pool(src, dst, mask, inv_cnt, w1s, w1d, b1, w2, b2,
                 *, tile_s, max_degree):
    deg, sp, hp = src.shape
    assert deg == max_degree and sp % tile_s == 0 and hp % 128 == 0
    return pl.pallas_call(
        _message_pool_kernel,
        out_shape=jax.ShapeDtypeStruct((sp, hp), jnp.float32),
        grid=(sp // tile_s,),
        in_specs=[
            pl.BlockSpec((deg, tile_s, hp), lambda i: (0, i, 0)),  # src (edge-major)
            pl.BlockSpec((tile_s, hp), lambda i: (i, 0)),          # dst (1 row/supernode)
            pl.BlockSpec((deg, tile_s, 1), lambda i: (0, i, 0)),   # validity mask
            pl.BlockSpec((tile_s, 1), lambda i: (i, 0)),           # 1 / neighbor count
            pl.BlockSpec((hp, hp), lambda i: (0, 0)),              # W1[:H]
            pl.BlockSpec((hp, hp), lambda i: (0, 0)),              # W1[H:]
            pl.BlockSpec((1, hp), lambda i: (0, 0)),               # b1
            pl.BlockSpec((hp, hp), lambda i: (0, 0)),              # W2
            pl.BlockSpec((1, hp), lambda i: (0, 0)),               # b2
        ],
        out_specs=pl.BlockSpec((tile_s, hp), lambda i: (i, 0)),
        compiler_params=pltpu.CompilerParams(
            dimension_semantics=("parallel",),
            vmem_limit_bytes=48 * 1024 * 1024),
    )(src, dst, mask, inv_cnt, w1s, w1d, b1, w2, b2)


# ----------------------------------------------------------------------------
# Glue: parameters, sincos tables, radius graph, full forward
# ----------------------------------------------------------------------------
def make_sincos_tables(hidden_dim, ndim, max_wavelength=10000.0):
    ndim_padding = hidden_dim % ndim
    dim_per_ndim = (hidden_dim - ndim_padding) // ndim
    sincos_padding = dim_per_ndim % 2
    padding = ndim_padding + sincos_padding * ndim
    eff = (hidden_dim - padding) // ndim
    # TODO(synk): handle ContinuousSincosEmbed trailing zero-padding when hidden_dim % (2*ndim) != 0
    assert padding == 0, "demo picks hidden_dim divisible by 2*ndim (no zero padding)"
    nfreq = len(range(0, eff, 2))
    omega = 1.0 / (max_wavelength ** (np.arange(0, eff, 2, dtype=np.float32) / eff))
    omega_mat = np.zeros((ndim, hidden_dim), dtype=np.float32)
    sin_mask = np.zeros((1, hidden_dim), dtype=np.float32)
    for d in range(ndim):
        base = d * eff
        omega_mat[d, base:base + nfreq] = omega        # sin columns
        omega_mat[d, base + nfreq:base + eff] = omega  # cos columns
        sin_mask[0, base:base + nfreq] = 1.0
    return jnp.asarray(omega_mat), jnp.asarray(sin_mask)


def init_params(key, input_dim, hidden_dim, ndim):
    ks = jax.random.split(key, 3)

    def lin(k, fan_in, fan_out):
        kw, kb = jax.random.split(k)
        bound = 1.0 / np.sqrt(fan_in)
        w = jax.random.uniform(kw, (fan_in, fan_out), jnp.float32, -bound, bound)
        b = jax.random.uniform(kb, (1, fan_out), jnp.float32, -bound, bound)
        return w, b

    w_in, b_in = lin(ks[0], input_dim, hidden_dim)
    w1, b1 = lin(ks[1], 2 * hidden_dim, hidden_dim)
    w2, b2 = lin(ks[2], hidden_dim, hidden_dim)
    omega_mat, sin_mask = make_sincos_tables(hidden_dim, ndim)
    return dict(w_in=w_in, b_in=b_in,
                w1_src=w1[:hidden_dim], w1_dst=w1[hidden_dim:], b1=b1,
                w2=w2, b2=b2, omega_mat=omega_mat, sin_mask=sin_mask)


def _round_up(x, m):
    return (x + m - 1) // m * m


def _pad_to(a, shape):
    return jnp.pad(a, [(0, t - s) for s, t in zip(a.shape, shape)])


def _build_graph(input_pos, supernode_idx, batch_idx, radius, max_degree):
    """radius_graph(flow='target_to_source', loop=True) restricted to supernode
    destinations, capped at max_degree neighbors per supernode (index order).
    Output supernodes are sorted (matches torch .unique() ordering)."""
    n = input_pos.shape[0]
    sup = jnp.sort(supernode_idx)
    d2 = jnp.sum((input_pos[sup][:, None, :] - input_pos[None, :, :]) ** 2, axis=-1)
    within = d2 <= radius * radius
    if batch_idx is not None:
        within = within & (batch_idx[sup][:, None] == batch_idx[None, :])
    idx = jnp.arange(n, dtype=jnp.int32)
    key = jnp.where(within, idx[None, :], n + idx[None, :])
    nbr_idx = jnp.argsort(key, axis=1)[:, :max_degree]       # (S, deg)
    valid = jnp.take_along_axis(within, nbr_idx, axis=1)      # (S, deg)
    return sup, nbr_idx, valid


def supernode_pooling_forward(params, input_feat, input_pos, supernode_idx,
                              batch_idx=None, *, radius, max_degree,
                              tile_n=512, tile_s=128):
    assert input_feat.ndim == 2 and input_pos.ndim == 2 and supernode_idx.ndim == 1
    n, f = input_feat.shape
    ndim = input_pos.shape[1]
    hidden = params["w_in"].shape[1]
    hp = _round_up(hidden, 128)                   # lane-dense channel padding

    # ---- zero-pad parameters to lane-dense H (padded columns stay exactly 0) --
    w_in = _pad_to(params["w_in"], (f, hp))
    b_in = _pad_to(params["b_in"], (1, hp))
    omega = _pad_to(params["omega_mat"], (ndim, hp))
    phase = _pad_to((1.0 - params["sin_mask"]) * (jnp.pi / 2.0), (1, hp))
    w1s = _pad_to(params["w1_src"], (hp, hp)).astype(jnp.bfloat16)
    w1d = _pad_to(params["w1_dst"], (hp, hp)).astype(jnp.bfloat16)
    b1 = _pad_to(params["b1"], (1, hp))
    w2 = _pad_to(params["w2"], (hp, hp)).astype(jnp.bfloat16)
    b2 = _pad_to(params["b2"], (1, hp))

    sup, nbr_idx, valid = _build_graph(input_pos, supernode_idx, batch_idx,
                                       radius, max_degree)
    s = sup.shape[0]

    # ---- Kernel 1: per-node embedding ----
    tn = min(tile_n, _round_up(n, 8))
    n_pad = _round_up(n, tn)
    feat_p = _pad_to(input_feat, (n_pad, f))
    pos_p = _pad_to(input_pos, (n_pad, ndim))
    h_nodes = node_embed(feat_p, pos_p, w_in, b_in, omega, phase, tile_n=tn)

    # ---- gather edge endpoints (glue), edge-major (deg, S, H) layout ----
    ts = min(tile_s, _round_up(s, 8))
    s_pad = _round_up(s, ts)
    nbr_p = _pad_to(nbr_idx, (s_pad, max_degree))
    valid_p = _pad_to(valid, (s_pad, max_degree))
    sup_p = jnp.pad(sup, (0, s_pad - s))
    # TODO(synk): fuse this src gather into kernel 2 (scalar-prefetch nbr_idx +
    # DMA gather from h_nodes kept in HBM) to avoid materializing the edge tensor.
    src = h_nodes[nbr_p.T].astype(jnp.bfloat16)           # (deg, Sp, Hp)
    dst = h_nodes[sup_p].astype(jnp.bfloat16)             # (Sp, Hp) — NOT replicated
    mask = valid_p.T[..., None].astype(jnp.float32)       # (deg, Sp, 1)
    inv_cnt = 1.0 / jnp.maximum(
        valid_p.sum(axis=1, keepdims=True).astype(jnp.float32), 1.0)  # (Sp, 1)

    # ---- Kernel 2: message MLP + masked segment mean ----
    pooled = message_pool(src, dst, mask, inv_cnt, w1s, w1d, b1, w2, b2,
                          tile_s=ts, max_degree=max_degree)
    pooled = pooled[:s, :hidden]

    batch_size = 1 if batch_idx is None else int(batch_idx.max()) + 1
    # TODO(synk): uneven per-batch supernode counts would misassign rows here
    # (same equal-count assumption as the torch module's rearrange/assert).
    return pooled.reshape(batch_size, s // batch_size, hidden)


def reference_forward(params, input_feat, input_pos, supernode_idx,
                      batch_idx=None, *, radius, max_degree):
    sup, nbr_idx, valid = _build_graph(input_pos, supernode_idx, batch_idx,
                                       radius, max_degree)
    hdim = params["w_in"].shape[1]
    x = input_feat @ params["w_in"] + params["b_in"]
    ang = input_pos @ params["omega_mat"]
    emb = params["sin_mask"] * jnp.sin(ang) + (1.0 - params["sin_mask"]) * jnp.cos(ang)
    x = x + emb
    src = x[nbr_idx]                       # (S, deg, H)
    dst = x[sup][:, None, :]               # (S, 1, H)
    h1 = src @ params["w1_src"] + dst @ params["w1_dst"] + params["b1"]
    g = jax.nn.gelu(h1, approximate=False)
    h2 = g @ params["w2"] + params["b2"]
    h2 = h2 * valid[..., None].astype(jnp.float32)
    pooled = h2.sum(axis=1) / valid.sum(axis=1, keepdims=True).astype(jnp.float32)
    bs = 1 if batch_idx is None else int(batch_idx.max()) + 1
    return pooled.reshape(bs, -1, hdim)


# ----------------------------------------------------------------------------
if __name__ == "__main__":
    key = jax.random.PRNGKey(0)
    n_points, input_dim, hidden_dim, ndim = 64, 16, 48, 3
    num_supernodes, max_degree, radius = 16, 8, 0.35

    kp, kf, kx, ks = jax.random.split(key, 4)
    params = init_params(kp, input_dim, hidden_dim, ndim)
    input_feat = jax.random.normal(kf, (n_points, input_dim), jnp.float32)
    input_pos = jax.random.uniform(kx, (n_points, ndim), jnp.float32)
    supernode_idx = jax.random.permutation(ks, n_points)[:num_supernodes].astype(jnp.int32)

    out = supernode_pooling_forward(params, input_feat, input_pos, supernode_idx,
                                    None, radius=radius, max_degree=max_degree)
    out = jax.block_until_ready(out)

    assert out.shape == (1, num_supernodes, hidden_dim), out.shape

    ref = reference_forward(params, input_feat, input_pos, supernode_idx,
                            None, radius=radius, max_degree=max_degree)
    ref = jax.block_until_ready(ref)
    # message MLP runs in bf16 on the MXU (f32 accumulation) -> ~1e-2 tolerance
    assert jnp.allclose(out, ref, atol=2e-2, rtol=2e-2), \
        f"max abs err {jnp.max(jnp.abs(out - ref))}"

    print("KERNEL_OK")
</pallas_src>

<mosaic_0001>
module attributes {stable_mosaic.version = 11 : i64} {
  func.func @_embed_kernel(%arg0: i32, %arg1: memref<64x16xf32, #tpu.memory_space<vmem>>, %arg2: memref<64x3xf32, #tpu.memory_space<vmem>>, %arg3: memref<16x128xf32, #tpu.memory_space<vmem>>, %arg4: memref<1x128xf32, #tpu.memory_space<vmem>>, %arg5: memref<3x128xf32, #tpu.memory_space<vmem>>, %arg6: memref<1x128xf32, #tpu.memory_space<vmem>>, %arg7: memref<64x128xf32, #tpu.memory_space<vmem>>) attributes {dimension_semantics = [#tpu.dimension_semantics<parallel>], iteration_bounds = array<i64: 1>, scalar_prefetch = 0 : i64, scratch_operands = 0 : i64, tpu.core_type = #tpu.core_type<tc>, window_params = [{transform_indices = @transform_0, window_bounds = array<i64: 64, 16>}, {transform_indices = @transform_1, window_bounds = array<i64: 64, 3>}, {pipeline_mode = #tpu.pipeline_mode<synchronous>, transform_indices = @transform_2, window_bounds = array<i64: 16, 128>}, {pipeline_mode = #tpu.pipeline_mode<synchronous>, transform_indices = @transform_3, window_bounds = array<i64: 1, 128>}, {pipeline_mode = #tpu.pipeline_mode<synchronous>, transform_indices = @transform_4, window_bounds = array<i64: 3, 128>}, {pipeline_mode = #tpu.pipeline_mode<synchronous>, transform_indices = @transform_5, window_bounds = array<i64: 1, 128>}, {transform_indices = @transform_6, window_bounds = array<i64: 64, 128>}]} {
    %c0 = arith.constant 0 : index
    %c0_0 = arith.constant 0 : index
    %0 = vector.load %arg1[%c0, %c0_0] : memref<64x16xf32, #tpu.memory_space<vmem>>, vector<64x16xf32>
    %c0_1 = arith.constant 0 : index
    %c0_2 = arith.constant 0 : index
    %1 = vector.load %arg3[%c0_1, %c0_2] : memref<16x128xf32, #tpu.memory_space<vmem>>, vector<16x128xf32>
    %cst = arith.constant dense<0.000000e+00> : vector<64x128xf32>
    %2 = tpu.matmul %0, %1, %cst {dimension_numbers = #tpu.dot_dimension_numbers<[1], [0], [0], [1], [0, 0, 1, 1], [], []>} : vector<64x16xf32>, vector<16x128xf32>, vector<64x128xf32> -> vector<64x128xf32>
    %c0_3 = arith.constant 0 : index
    %c0_4 = arith.constant 0 : index
    %3 = vector.load %arg4[%c0_3, %c0_4] : memref<1x128xf32, #tpu.memory_space<vmem>>, vector<1x128xf32>
    %4 = vector.broadcast %3 : vector<1x128xf32> to vector<64x128xf32>
    %5 = arith.addf %2, %4 : vector<64x128xf32>
    %c0_5 = arith.constant 0 : index
    %c0_6 = arith.constant 0 : index
    %6 = vector.load %arg2[%c0_5, %c0_6] : memref<64x3xf32, #tpu.memory_space<vmem>>, vector<64x3xf32>
    %c0_7 = arith.constant 0 : index
    %c0_8 = arith.constant 0 : index
    %7 = vector.load %arg5[%c0_7, %c0_8] : memref<3x128xf32, #tpu.memory_space<vmem>>, vector<3x128xf32>
    %cst_9 = arith.constant 0.000000e+00 : f32
    %8 = vector.broadcast %cst_9 : f32 to vector<64x128xf32>
    %9 = vector.extract_strided_slice %6 {offsets = [0, 0], sizes = [64, 1], strides = [1, 1]} : vector<64x3xf32> to vector<64x1xf32>
    %10 = vector.extract_strided_slice %7 {offsets = [0, 0], sizes = [1, 128], strides = [1, 1]} : vector<3x128xf32> to vector<1x128xf32>
    %11 = vector.broadcast %9 : vector<64x1xf32> to vector<64x128xf32>
    %12 = vector.broadcast %10 : vector<1x128xf32> to vector<64x128xf32>
    %13 = arith.mulf %11, %12 : vector<64x128xf32>
    %14 = arith.addf %8, %13 : vector<64x128xf32>
    %15 = vector.extract_strided_slice %6 {offsets = [0, 1], sizes = [64, 1], strides = [1, 1]} : vector<64x3xf32> to vector<64x1xf32>
    %16 = vector.extract_strided_slice %7 {offsets = [1, 0], sizes = [1, 128], strides = [1, 1]} : vector<3x128xf32> to vector<1x128xf32>
    %17 = vector.broadcast %15 : vector<64x1xf32> to vector<64x128xf32>
    %18 = vector.broadcast %16 : vector<1x128xf32> to vector<64x128xf32>
    %19 = arith.mulf %17, %18 : vector<64x128xf32>
    %20 = arith.addf %14, %19 : vector<64x128xf32>
    %21 = vector.extract_strided_slice %6 {offsets = [0, 2], sizes = [64, 1], strides = [1, 1]} : vector<64x3xf32> to vector<64x1xf32>
    %22 = vector.extract_strided_slice %7 {offsets = [2, 0], sizes = [1, 128], strides = [1, 1]} : vector<3x128xf32> to vector<1x128xf32>
    %23 = vector.broadcast %21 : vector<64x1xf32> to vector<64x128xf32>
    %24 = vector.broadcast %22 : vector<1x128xf32> to vector<64x128xf32>
    %25 = arith.mulf %23, %24 : vector<64x128xf32>
    %26 = arith.addf %20, %25 : vector<64x128xf32>
    %c0_10 = arith.constant 0 : index
    %c0_11 = arith.constant 0 : index
    %27 = vector.load %arg6[%c0_10, %c0_11] : memref<1x128xf32, #tpu.memory_space<vmem>>, vector<1x128xf32>
    %28 = vector.broadcast %27 : vector<1x128xf32> to vector<64x128xf32>
    %29 = arith.addf %26, %28 : vector<64x128xf32>
    %30 = math.sin %29 : vector<64x128xf32>
    %31 = arith.addf %5, %30 : vector<64x128xf32>
    %c0_12 = arith.constant 0 : index
    %c0_13 = arith.constant 0 : index
    %32 = vector.load %arg7[%c0_12, %c0_13] : memref<64x128xf32, #tpu.memory_space<vmem>>, vector<64x128xf32>
    tpu.vector_store %arg7[%c0_12, %c0_13], %31 {strides = array<i32>} : memref<64x128xf32, #tpu.memory_space<vmem>>, vector<64x128xf32>,
    return
  }
  func.func @transform_0(%arg0: i32) -> (i32, i32) {
    %c0_i32 = arith.constant 0 : i32
    %c0_i32_0 = arith.constant 0 : i32
    return %arg0, %c0_i32 : i32, i32
  }
  func.func @transform_1(%arg0: i32) -> (i32, i32) {
    %c0_i32 = arith.constant 0 : i32
    %c0_i32_0 = arith.constant 0 : i32
    return %arg0, %c0_i32 : i32, i32
  }
  func.func @transform_2(%arg0: i32) -> (i32, i32) {
    %c0_i32 = arith.constant 0 : i32
    %c0_i32_0 = arith.constant 0 : i32
    %c0_i32_1 = arith.constant 0 : i32
    return %c0_i32, %c0_i32_0 : i32, i32
  }
  func.func @transform_3(%arg0: i32) -> (i32, i32) {
    %c0_i32 = arith.constant 0 : i32
    %c0_i32_0 = arith.constant 0 : i32
    %c0_i32_1 = arith.constant 0 : i32
    return %c0_i32, %c0_i32_0 : i32, i32
  }
  func.func @transform_4(%arg0: i32) -> (i32, i32) {
    %c0_i32 = arith.constant 0 : i32
    %c0_i32_0 = arith.constant 0 : i32
    %c0_i32_1 = arith.constant 0 : i32
    return %c0_i32, %c0_i32_0 : i32, i32
  }
  func.func @transform_5(%arg0: i32) -> (i32, i32) {
    %c0_i32 = arith.constant 0 : i32
    %c0_i32_0 = arith.constant 0 : i32
    %c0_i32_1 = arith.constant 0 : i32
    return %c0_i32, %c0_i32_0 : i32, i32
  }
  func.func @transform_6(%arg0: i32) -> (i32, i32) {
    %c0_i32 = arith.constant 0 : i32
    %c0_i32_0 = arith.constant 0 : i32
    return %arg0, %c0_i32 : i32, i32
  }
}

</mosaic_0001>

<llo_original>
// kernel: tpu_custom_call.1
$region0: #{tpu_custom_call.1}
  #allocation0 [shape = 'u32[]', space=smem, size = 0x4, offset = 0x4, fixed_abs, tag = 'smem constant byte address 0x4 - core index']
  #allocation1 [shape = 'u32[144,128]{1,0:T(1,128)}', space=vmem, size = 0x12000, scoped, tag = 'internal scratch']
  %s0 = inlined_call_operand.vmem [shape: f32[64,16], index: 0, kind: input, shape index: {}]
  %s1 = inlined_call_operand.vmem [shape: f32[64,3], index: 1, kind: input, shape index: {}]
  %s2 = inlined_call_operand.vmem [shape: f32[16,128], index: 2, kind: input, shape index: {}]
  %s3 = inlined_call_operand.vmem [shape: f32[1,128], index: 3, kind: input, shape index: {}]
  %s4 = inlined_call_operand.vmem [shape: f32[3,128], index: 4, kind: input, shape index: {}]
  %s5 = inlined_call_operand.vmem [shape: f32[1,128], index: 5, kind: input, shape index: {}]
  %s6 = inlined_call_operand.hbm [shape: f32[64,128], index: 6, kind: output, shape index: {}]
  %s7 = sld [smem:[#allocation0]]
  $region34: #{tpu_custom_call.1} parent=0
    _
  %s9 = ssub.s32 1, %s7
  %s10 = scalar_select 0, %s9, %s7
  $region1: #{tpu_custom_call.1} parent=0
    #allocation2 [shape = 'u8[32768]{0}', space=vmem, size = 0x8000, scoped, tag = 'output window, operand 0, single buffered']
    #allocation3 [shape = 's32[1]{0}', space=sflag, size = 0x4, scoped, tag = 'scoped memory for tpu_custom_call.1']
    %11 = vsyncpa [#allocation3], 0
    // Predicated region
    $region2: #{tpu_custom_call.1} parent=1 // pred_check
      _
    $region3: #{tpu_custom_call.1} parent=1 // pred_check_branch
      %13 = sbr.rel (0) target = $region5
    $region4: #{tpu_custom_call.1} parent=1 // pred_region
      _
    $region5: #{tpu_custom_call.1} parent=1 // pred_fallthru
      _
    // Predicated region
    $region6: #{tpu_custom_call.1} parent=1 // pred_check
      _
    $region7: #{tpu_custom_call.1} parent=1 // pred_check_branch
      %15 = sbr.rel (0) target = $region9
    $region8: #{tpu_custom_call.1} parent=1 // pred_region
      _
    $region9: #{tpu_custom_call.1} parent=1 // pred_fallthru
      _
    // Predicated region
    $region10: #{tpu_custom_call.1} parent=1 // pred_check
      _
    $region11: #{tpu_custom_call.1} parent=1 // pred_check_branch
      %17 = sbr.rel (0) target = $region13
    $region12: #{tpu_custom_call.1} parent=1 // pred_region
      _
    $region13: #{tpu_custom_call.1} parent=1 // pred_fallthru
      _
    // Predicated region
    $region14: #{tpu_custom_call.1} parent=1 // pred_check
      _
    $region15: #{tpu_custom_call.1} parent=1 // pred_check_branch
      %19 = sbr.rel (0) target = $region17
    $region16: #{tpu_custom_call.1} parent=1 // pred_region
      _
    $region17: #{tpu_custom_call.1} parent=1 // pred_fallthru
      _
    // Predicated region
    $region18: #{tpu_custom_call.1} parent=1 // pred_check
      _
    $region19: #{tpu_custom_call.1} parent=1 // pred_check_branch
      %21 = sbr.rel (0) target = $region21
    $region20: #{tpu_custom_call.1} parent=1 // pred_region
      _
    $region21: #{tpu_custom_call.1} parent=1 // pred_fallthru
      _
    // Predicated region
    $region22: #{tpu_custom_call.1} parent=1 // pred_check
      _
    $region23: #{tpu_custom_call.1} parent=1 // pred_check_branch
      %23 = sbr.rel (0) target = $region25
    $region24: #{tpu_custom_call.1} parent=1 // pred_region
      _
    $region25: #{tpu_custom_call.1} parent=1 // pred_fallthru
      _
    %v24 = vld [vmem:[%s0] sm:$0xff]
    %v25 = vld [vmem:[%s0 + $0x8] sm:$0xff]
    %v26 = vld [vmem:[%s0 + $0x10] sm:$0xff]
    %v27 = vld [vmem:[%s0 + $0x18] sm:$0xff]
    %v28 = vld [vmem:[%s0 + $0x20] sm:$0xff]
    %v29 = vld [vmem:[%s0 + $0x28] sm:$0xff]
    %v30 = vld [vmem:[%s0 + $0x30] sm:$0xff]
    %v31 = vld [vmem:[%s0 + $0x38] sm:$0xff]
    %v32 = vld [vmem:[%s2] sm:$0xff]
    %v33 = vld [vmem:[%s2 + $0x8] sm:$0xff]
    %v34 = vld [vmem:[%s3] sm:$0x1]
    %v36 = vlaneseq
    %v37 = vshrl.u32 %v36, 7
    %v38 = vsub.s32 0, %v37
    %v39 = vrot.slane %v34, %v38
    %vm41 = vcmask 130048
    %v43 = vsel %vm41, %v24, 0
    %v46 = vsel %vm41, %v25, 0
    %v49 = vsel %vm41, %v26, 0
    %v52 = vsel %vm41, %v27, 0
    %v55 = vsel %vm41, %v28, 0
    %v58 = vsel %vm41, %v29, 0
    %v61 = vsel %vm41, %v30, 0
    %v64 = vsel %vm41, %v31, 0
    %66 = vmatprep.subr.mxu0 0.0
    %67 = vmatpush1.msra.mxu0 0.0
    %68 = vmatprep.subr.mxu0 0.0
    %69 = vmatpush1.msra.mxu0 0.0
    %70 = vmatprep.subr.mxu0 0.0
    %71 = vmatpush1.msra.mxu0 0.0
    %72 = vmatprep.subr.mxu0 0.0
    %73 = vmatpush1.msra.mxu0 0.0
    %74 = vmatprep.subr.mxu0 0.0
    %75 = vmatpush1.msra.mxu0 0.0
    %76 = vmatprep.subr.mxu0 0.0
    %77 = vmatpush1.msra.mxu0 0.0
    %78 = vmatprep.subr.mxu0 0.0
    %79 = vmatpush1.msra.mxu0 0.0
    %80 = vmatprep.subr.mxu0 0.0
    %81 = vmatpush1.msra.mxu0 0.0
    %82 = vmatprep.subr.mxu0 0.0
    %83 = vmatpush1.msra.mxu0 0.0
    %84 = vmatprep.subr.mxu0 0.0
    %85 = vmatpush1.msra.mxu0 0.0
    %86 = vmatprep.subr.mxu0 0.0
    %87 = vmatpush1.msra.mxu0 0.0
    %88 = vmatprep.subr.mxu0 0.0
    %89 = vmatpush1.msra.mxu0 0.0
    %90 = vmatprep.subr.mxu0 0.0
    %91 = vmatpush1.msra.mxu0 0.0
    %92 = vmatprep.subr.mxu0 0.0
    %93 = vmatpush1.msra.mxu0 0.0
    %94 = vmatprep.subr.mxu0 0.0
    %95 = vmatpush1.msra.mxu0 %v33
    %96 = vmatprep.subr.mxu0 0.0
    %97 = vmatpush1.msra.mxu0 %v32
    %98 = vmatprep.subr.mxu0 0.0
    %99 = vmatpush2.msra.mxu0 0.0
    %100 = vmatprep.subr.mxu0 0.0
    %101 = vmatpush2.msra.mxu0 0.0
    %102 = vmatprep.subr.mxu0 0.0
    %103 = vmatpush2.msra.mxu0 0.0
    %104 = vmatprep.subr.mxu0 0.0
    %105 = vmatpush2.msra.mxu0 0.0
    %106 = vmatprep.subr.mxu0 0.0
    %107 = vmatpush2.msra.mxu0 0.0
    %108 = vmatprep.subr.mxu0 0.0
    %109 = vmatpush2.msra.mxu0 0.0
    %110 = vmatprep.subr.mxu0 0.0
    %111 = vmatpush2.msra.mxu0 0.0
    %112 = vmatprep.subr.mxu0 0.0
    %113 = vmatpush2.msra.mxu0 0.0
    %114 = vmatprep.subr.mxu0 0.0
    %115 = vmatpush2.msra.mxu0 0.0
    %116 = vmatprep.subr.mxu0 0.0
    %117 = vmatpush2.msra.mxu0 0.0
    %118 = vmatprep.subr.mxu0 0.0
    %119 = vmatpush2.msra.mxu0 0.0
    %120 = vmatprep.subr.mxu0 0.0
    %121 = vmatpush2.msra.mxu0 0.0
    %122 = vmatprep.subr.mxu0 0.0
    %123 = vmatpush2.msra.mxu0 0.0
    %124 = vmatprep.subr.mxu0 0.0
    %125 = vmatpush2.msra.mxu0 0.0
    %126 = vmatprep.subr.mxu0 0.0
    %127 = vmatpush2.msra.mxu0 0.0
    %128 = vmatprep.subr.mxu0 0.0
    %129 = vmatpush2.msra.mxu0 0.0
    %130 = vmatprep.mubr.f32.mxu0 0.0
    %131 = vmatmul.mubr.f32.gmra.mxu0 %v43
    %v132 = vpop.f32.mrf.mxu0
    %v133 = vadd.f32 %v39, %v132
    %v134 = vpop.f32.mrf.mxu0
    %135 = vmatprep.mubr.f32.mxu0 0.0
    %136 = vmatmul.mubr.f32.gmra.mxu0 %v46
    %v137 = vpop.f32.mrf.mxu0
    %v138 = vadd.f32 %v39, %v137
    %v139 = vpop.f32.mrf.mxu0
    %140 = vmatprep.mubr.f32.mxu0 0.0
    %141 = vmatmul.mubr.f32.gmra.mxu0 %v49
    %v142 = vpop.f32.mrf.mxu0
    %v143 = vadd.f32 %v39, %v142
    %v144 = vpop.f32.mrf.mxu0
    %145 = vmatprep.mubr.f32.mxu0 0.0
    %146 = vmatmul.mubr.f32.gmra.mxu0 %v52
    %v147 = vpop.f32.mrf.mxu0
    %v148 = vadd.f32 %v39, %v147
    %v149 = vpop.f32.mrf.mxu0
    %150 = vmatprep.mubr.f32.mxu0 0.0
    %151 = vmatmul.mubr.f32.gmra.mxu0 %v55
    %v152 = vpop.f32.mrf.mxu0
    %v153 = vadd.f32 %v39, %v152
    %v154 = vpop.f32.mrf.mxu0
    %155 = vmatprep.mubr.f32.mxu0 0.0
    %156 = vmatmul.mubr.f32.gmra.mxu0 %v58
    %v157 = vpop.f32.mrf.mxu0
    %v158 = vadd.f32 %v39, %v157
    %v159 = vpop.f32.mrf.mxu0
    %160 = vmatprep.mubr.f32.mxu0 0.0
    %161 = vmatmul.mubr.f32.gmra.mxu0 %v61
    %v162 = vpop.f32.mrf.mxu0
    %v163 = vadd.f32 %v39, %v162
    %v164 = vpop.f32.mrf.mxu0
    %165 = vmatprep.mubr.f32.mxu0 0.0
    %166 = vmatmul.mubr.f32.gmra.mxu0 %v64
    %v167 = vpop.f32.mrf.mxu0
    %v168 = vadd.f32 %v39, %v167
    %v169 = vpop.f32.mrf.mxu0
    %170 = vdwg.mxu0
    %v171 = vld [vmem:[%s1] sm:$0xff]
    %v172 = vld [vmem:[%s1 + $0x8] sm:$0xff]
    %v173 = vld [vmem:[%s1 + $0x10] sm:$0xff]
    %v174 = vld [vmem:[%s1 + $0x18] sm:$0xff]
    %v175 = vld [vmem:[%s1 + $0x20] sm:$0xff]
    %v176 = vld [vmem:[%s1 + $0x28] sm:$0xff]
    %v177 = vld [vmem:[%s1 + $0x30] sm:$0xff]
    %v178 = vld [vmem:[%s1 + $0x38] sm:$0xff]
    %v179 = vld [vmem:[%s4] sm:$0x7]
    %181 = vset.pattern.permute.xlu0 0
    %182 = vperm.xlu0 %181, %v171
    %v183 = vpop.permute.xlu0 %182
    %186 = vset.pattern.permute.xlu0 0
    %187 = vperm.xlu0 %186, %v172
    %v188 = vpop.permute.xlu0 %187
    %191 = vset.pattern.permute.xlu0 0
    %192 = vperm.xlu0 %191, %v173
    %v193 = vpop.permute.xlu0 %192
    %196 = vset.pattern.permute.xlu0 0
    %197 = vperm.xlu0 %196, %v174
    %v198 = vpop.permute.xlu0 %197
    %201 = vset.pattern.permute.xlu0 0
    %202 = vperm.xlu0 %201, %v175
    %v203 = vpop.permute.xlu0 %202
    %206 = vset.pattern.permute.xlu0 0
    %207 = vperm.xlu0 %206, %v176
    %v208 = vpop.permute.xlu0 %207
    %211 = vset.pattern.permute.xlu0 0
    %212 = vperm.xlu0 %211, %v177
    %v213 = vpop.permute.xlu0 %212
    %216 = vset.pattern.permute.xlu0 0
    %217 = vperm.xlu0 %216, %v178
    %v218 = vpop.permute.xlu0 %217
    %v220 = vlaneseq
    %v221 = vshrl.u32 %v220, 7
    %v222 = vsub.s32 0, %v221
    %v223 = vrot.slane %v179, %v222
    %v224 = vmul.f32 %v183, %v223
    %v225 = vmul.f32 %v188, %v223
    %v226 = vmul.f32 %v193, %v223
    %v227 = vmul.f32 %v198, %v223
    %v228 = vmul.f32 %v203, %v223
    %v229 = vmul.f32 %v208, %v223
    %v230 = vmul.f32 %v213, %v223
    %v231 = vmul.f32 %v218, %v223
    %v232 = vadd.f32 %v224, 0.0
    %v233 = vadd.f32 %v225, 0.0
    %v234 = vadd.f32 %v226, 0.0
    %v235 = vadd.f32 %v227, 0.0
    %v236 = vadd.f32 %v228, 0.0
    %v237 = vadd.f32 %v229, 0.0
    %v238 = vadd.f32 %v230, 0.0
    %v239 = vadd.f32 %v231, 0.0
    %240 = vset.pattern.permute.xlu0 1
    %241 = vperm.xlu0 %240, %v171
    %v242 = vpop.permute.xlu0 %241
    %244 = vset.pattern.permute.xlu0 1
    %245 = vperm.xlu0 %244, %v172
    %v246 = vpop.permute.xlu0 %245
    %248 = vset.pattern.permute.xlu0 1
    %249 = vperm.xlu0 %248, %v173
    %v250 = vpop.permute.xlu0 %249
    %252 = vset.pattern.permute.xlu0 1
    %253 = vperm.xlu0 %252, %v174
    %v254 = vpop.permute.xlu0 %253
    %256 = vset.pattern.permute.xlu0 1
    %257 = vperm.xlu0 %256, %v175
    %v258 = vpop.permute.xlu0 %257
    %260 = vset.pattern.permute.xlu0 1
    %261 = vperm.xlu0 %260, %v176
    %v262 = vpop.permute.xlu0 %261
    %264 = vset.pattern.permute.xlu0 1
    %265 = vperm.xlu0 %264, %v177
    %v266 = vpop.permute.xlu0 %265
    %268 = vset.pattern.permute.xlu0 1
    %269 = vperm.xlu0 %268, %v178
    %v270 = vpop.permute.xlu0 %269
    %v272 = vlaneseq
    %v273 = vshrl.u32 %v272, 7
    %v274 = vsub.s32 1, %v273
    %v275 = vrot.slane %v179, %v274
    %v276 = vmul.f32 %v242, %v275
    %v277 = vmul.f32 %v246, %v275
    %v278 = vmul.f32 %v250, %v275
    %v279 = vmul.f32 %v254, %v275
    %v280 = vmul.f32 %v258, %v275
    %v281 = vmul.f32 %v262, %v275
    %v282 = vmul.f32 %v266, %v275
    %v283 = vmul.f32 %v270, %v275
    %v284 = vadd.f32 %v232, %v276
    %v285 = vadd.f32 %v233, %v277
    %v286 = vadd.f32 %v234, %v278
    %v287 = vadd.f32 %v235, %v279
    %v288 = vadd.f32 %v236, %v280
    %v289 = vadd.f32 %v237, %v281
    %v290 = vadd.f32 %v238, %v282
    %v291 = vadd.f32 %v239, %v283
    %292 = vset.pattern.permute.xlu0 2
    %293 = vperm.xlu0 %292, %v171
    %v294 = vpop.permute.xlu0 %293
    %296 = vset.pattern.permute.xlu0 2
    %297 = vperm.xlu0 %296, %v172
    %v298 = vpop.permute.xlu0 %297
    %300 = vset.pattern.permute.xlu0 2
    %301 = vperm.xlu0 %300, %v173
    %v302 = vpop.permute.xlu0 %301
    %304 = vset.pattern.permute.xlu0 2
    %305 = vperm.xlu0 %304, %v174
    %v306 = vpop.permute.xlu0 %305
    %308 = vset.pattern.permute.xlu0 2
    %309 = vperm.xlu0 %308, %v175
    %v310 = vpop.permute.xlu0 %309
    %312 = vset.pattern.permute.xlu0 2
    %313 = vperm.xlu0 %312, %v176
    %v314 = vpop.permute.xlu0 %313
    %316 = vset.pattern.permute.xlu0 2
    %317 = vperm.xlu0 %316, %v177
    %v318 = vpop.permute.xlu0 %317
    %320 = vset.pattern.permute.xlu0 2
    %321 = vperm.xlu0 %320, %v178
    %v322 = vpop.permute.xlu0 %321
    %v324 = vlaneseq
    %v325 = vshrl.u32 %v324, 7
    %v326 = vsub.s32 2, %v325
    %v327 = vrot.slane %v179, %v326
    %v328 = vmul.f32 %v294, %v327
    %v329 = vmul.f32 %v298, %v327
    %v330 = vmul.f32 %v302, %v327
    %v331 = vmul.f32 %v306, %v327
    %v332 = vmul.f32 %v310, %v327
    %v333 = vmul.f32 %v314, %v327
    %v334 = vmul.f32 %v318, %v327
    %v335 = vmul.f32 %v322, %v327
    %v336 = vadd.f32 %v284, %v328
    %v337 = vadd.f32 %v285, %v329
    %v338 = vadd.f32 %v286, %v330
    %v339 = vadd.f32 %v287, %v331
    %v340 = vadd.f32 %v288, %v332
    %v341 = vadd.f32 %v289, %v333
    %v342 = vadd.f32 %v290, %v334
    %v343 = vadd.f32 %v291, %v335
    %v344 = vld [vmem:[%s5] sm:$0x1]
    %v346 = vlaneseq
    %v347 = vshrl.u32 %v346, 7
    %v348 = vsub.s32 0, %v347
    %v349 = vrot.slane %v344, %v348
    %v351 = vadd.f32 %v336, %v349
    %v352 = vadd.f32 %v337, %v349
    %v353 = vadd.f32 %v338, %v349
    %v354 = vadd.f32 %v339, %v349
    %v355 = vadd.f32 %v340, %v349
    %v356 = vadd.f32 %v341, %v349
    %v357 = vadd.f32 %v342, %v349
    %v358 = vadd.f32 %v343, %v349
    %v359 = vand.u32 2147483647, %v351
    %vm360 = vcmp.le.f32.partialorder %v359, 0.7853982
    %vm361 = vcmp.lt.s32.totalorder %v351, 0
    %v362 = vand.u32 %v351, 2139095040
    %v363 = vshrl.u32 %v362, 23
    %v364 = vsub.s32 %v363, 127
    %v365 = vand.u32 2147483647, %v351
    %v366 = vand.u32 %v365, 8388607
    %v367 = vor.u32 %v366, 8388608
    %v368 = vsub.s32 0, %v367
    %v369 = vadd.s32 %v364, 1
    %vm370 = vcmp.gt.s32.totalorder %v369, 0
    %v371 = vsel %vm370, %v369, 0
    %v372 = vshrl.u32 %v371, 5
    %v373 = vand.u32 %v371, 31
    %v374 = vsub.s32 32, %v373
    %v375 = vshrl.u32 683565275, %v374
    %v376 = vshll.u32 683565275, %v373
    %v377 = vshrl.u32 2475754826, %v374
    %v378 = vor.u32 %v376, %v377
    %v379 = vshll.u32 2475754826, %v373
    %v380 = vshrl.u32 2131351028, %v374
    %v381 = vor.u32 %v379, %v380
    %v382 = vshll.u32 2131351028, %v373
    %v383 = vshrl.u32 2102212464, %v374
    %v384 = vor.u32 %v382, %v383
    %v385 = vshll.u32 2102212464, %v373
    %v386 = vshrl.u32 920167782, %v374
    %v387 = vor.u32 %v385, %v386
    %v388 = vshll.u32 920167782, %v373
    %v389 = vshrl.u32 1326507024, %v374
    %v390 = vor.u32 %v388, %v389
    %vm391 = vcmp.lt.s32.totalorder %v372, 1
    %vm392 = vcmp.lt.s32.totalorder %v372, 2
    %vm393 = vcmp.lt.s32.totalorder %v372, 3
    %vm394 = vcmp.lt.s32.totalorder %v372, 4
    %v395 = vsel %vm391, %v375, %v378
    %v396 = vsel %vm394, %v384, 2102212464
    %v397 = vsel %vm393, %v381, %v396
    %v398 = vsel %vm392, %v395, %v397
    %v399 = vsel %vm391, %v378, %v381
    %v400 = vsel %vm394, %v387, 920167782
    %v401 = vsel %vm393, %v384, %v400
    %v402 = vsel %vm392, %v399, %v401
    %v403 = vsel %vm391, %v381, %v384
    %v404 = vsel %vm394, %v390, 1326507024
    %v405 = vsel %vm393, %v387, %v404
    %v406 = vsel %vm392, %v403, %v405
    %v407 = vshll.u32 %v367, 8
    %v408 = vmul.u32.u64.compose %v407, %v406
    %v409 = vextract.low.u32 %v408
    %v410 = vextract.high.u32 %v408
    %v411 = vmul.u32.u64.compose %v407, %v402
    %v412 = vextract.low.u32 %v411
    %v413 = vextract.high.u32 %v411
    %v414 = vmul.u32 %v407, %v398
    %v415 = vadd.s32 %v410, %v412
    %vm416 = vc.u32 %v410, %v412
    %v417 = vadd.s32 %v413, 1
    %v418 = vsel %vm416, %v417, %v413
    %v419 = vadd.s32 %v414, %v418
    %v420 = vadd.s32 %v419, 536870912
    %v421 = vshrl.u32 %v420, 30
    %v422 = vshll.u32 %v421, 30
    %v423 = vsub.s32 %v419, %v422
    %vm424 = vcmp.lt.s32.totalorder %v423, 0
    %v425 = vsub.s32 0, %v423
    %v426 = vsel %vm424, %v425, %v423
    %v427 = vclz %v426
    %v428 = vsub.s32 %v427, 2
    %vm429 = vcmp.gt.s32.totalorder 0, %v428
    %v430 = vsel %vm429, 0, %v428
    %v431 = vsub.s32 32, %v430
    %v432 = vshll.u32 %v423, %v430
    %v433 = vshrl.u32 %v415, %v431
    %v434 = vor.u32 %v432, %v433
    %v435 = vsub.s32 4294967266, %v430
    %v436 = vadd.s32 %v435, 127
    %v437 = vshll.u32 %v436, 23
    %v438 = vor.u32 4788187, %v437
    %v439 = vand.u32 2147483647, %v438
    %v441 = vcvt.s32.f32 %v434
    %v442 = vmul.f32 %v441, %v439
    %v443 = vxor.u32 %v442, 2147483648
    %v444 = vsel %vm361, %v443, %v442
    %v445 = vsub.s32 4, %v421
    %v446 = vsel %vm361, %v445, %v421
    %v447 = vsel %vm360, %v351, %v444
    %v448 = vsel %vm360, 0, %v446
    %v449 = vcosq.f32.pop %v447
    %v450 = vsinq.f32.pop %v447
    %vm451 = vweird.f32 %v351
    %v452 = vadd.s32 %v448, 3
    %v453 = vand.u32 %v452, 3
    %vm454 = vcmp.lt.s32.totalorder %v453, 2
    %vm455 = vcmp.eq.s32.totalorder %v453, 0
    %v456 = vxor.u32 %v450, 2147483648
    %v457 = vsel %vm455, %v449, %v456
    %vm458 = vcmp.eq.s32.totalorder %v453, 2
    %v459 = vxor.u32 %v449, 2147483648
    %v460 = vsel %vm458, %v459, %v450
    %v461 = vsel %vm454, %v457, %v460
    %v462 = vsel %vm451, nan, %v461
    %v463 = vand.u32 2147483647, %v352
    %vm464 = vcmp.le.f32.partialorder %v463, 0.7853982
    %vm465 = vcmp.lt.s32.totalorder %v352, 0
    %v466 = vand.u32 %v352, 2139095040
    %v467 = vshrl.u32 %v466, 23
    %v468 = vsub.s32 %v467, 127
    %v469 = vand.u32 2147483647, %v352
    %v470 = vand.u32 %v469, 8388607
    %v471 = vor.u32 %v470, 8388608
    %v472 = vsub.s32 0, %v471
    %v473 = vadd.s32 %v468, 1
    %vm474 = vcmp.gt.s32.totalorder %v473, 0
    %v475 = vsel %vm474, %v473, 0
    %v476 = vshrl.u32 %v475, 5
    %v477 = vand.u32 %v475, 31
    %v478 = vsub.s32 32, %v477
    %v479 = vshrl.u32 683565275, %v478
    %v480 = vshll.u32 683565275, %v477
    %v481 = vshrl.u32 2475754826, %v478
    %v482 = vor.u32 %v480, %v481
    %v483 = vshll.u32 2475754826, %v477
    %v484 = vshrl.u32 2131351028, %v478
    %v485 = vor.u32 %v483, %v484
    %v486 = vshll.u32 2131351028, %v477
    %v487 = vshrl.u32 2102212464, %v478
    %v488 = vor.u32 %v486, %v487
    %v489 = vshll.u32 2102212464, %v477
    %v490 = vshrl.u32 920167782, %v478
    %v491 = vor.u32 %v489, %v490
    %v492 = vshll.u32 920167782, %v477
    %v493 = vshrl.u32 1326507024, %v478
    %v494 = vor.u32 %v492, %v493
    %vm495 = vcmp.lt.s32.totalorder %v476, 1
    %vm496 = vcmp.lt.s32.totalorder %v476, 2
    %vm497 = vcmp.lt.s32.totalorder %v476, 3
    %vm498 = vcmp.lt.s32.totalorder %v476, 4
    %v499 = vsel %vm495, %v479, %v482
    %v500 = vsel %vm498, %v488, 2102212464
    %v501 = vsel %vm497, %v485, %v500
    %v502 = vsel %vm496, %v499, %v501
    %v503 = vsel %vm495, %v482, %v485
    %v504 = vsel %vm498, %v491, 920167782
    %v505 = vsel %vm497, %v488, %v504
    %v506 = vsel %vm496, %v503, %v505
    %v507 = vsel %vm495, %v485, %v488
    %v508 = vsel %vm498, %v494, 1326507024
    %v509 = vsel %vm497, %v491, %v508
    %v510 = vsel %vm496, %v507, %v509
    %v511 = vshll.u32 %v471, 8
    %v512 = vmul.u32.u64.compose %v511, %v510
    %v513 = vextract.low.u32 %v512
    %v514 = vextract.high.u32 %v512
    %v515 = vmul.u32.u64.compose %v511, %v506
    %v516 = vextract.low.u32 %v515
    %v517 = vextract.high.u32 %v515
    %v518 = vmul.u32 %v511, %v502
    %v519 = vadd.s32 %v514, %v516
    %vm520 = vc.u32 %v514, %v516
    %v521 = vadd.s32 %v517, 1
    %v522 = vsel %vm520, %v521, %v517
    %v523 = vadd.s32 %v518, %v522
    %v524 = vadd.s32 %v523, 536870912
    %v525 = vshrl.u32 %v524, 30
    %v526 = vshll.u32 %v525, 30
    %v527 = vsub.s32 %v523, %v526
    %vm528 = vcmp.lt.s32.totalorder %v527, 0
    %v529 = vsub.s32 0, %v527
    %v530 = vsel %vm528, %v529, %v527
    %v531 = vclz %v530
    %v532 = vsub.s32 %v531, 2
    %vm533 = vcmp.gt.s32.totalorder 0, %v532
    %v534 = vsel %vm533, 0, %v532
    %v535 = vsub.s32 32, %v534
    %v536 = vshll.u32 %v527, %v534
    %v537 = vshrl.u32 %v519, %v535
    %v538 = vor.u32 %v536, %v537
    %v539 = vsub.s32 4294967266, %v534
    %v540 = vadd.s32 %v539, 127
    %v541 = vshll.u32 %v540, 23
    %v542 = vor.u32 4788187, %v541
    %v543 = vand.u32 2147483647, %v542
    %v545 = vcvt.s32.f32 %v538
    %v546 = vmul.f32 %v545, %v543
    %v547 = vxor.u32 %v546, 2147483648
    %v548 = vsel %vm465, %v547, %v546
    %v549 = vsub.s32 4, %v525
    %v550 = vsel %vm465, %v549, %v525
    %v551 = vsel %vm464, %v352, %v548
    %v552 = vsel %vm464, 0, %v550
    %v553 = vcosq.f32.pop %v551
    %v554 = vsinq.f32.pop %v551
    %vm555 = vweird.f32 %v352
    %v556 = vadd.s32 %v552, 3
    %v557 = vand.u32 %v556, 3
    %vm558 = vcmp.lt.s32.totalorder %v557, 2
    %vm559 = vcmp.eq.s32.totalorder %v557, 0
    %v560 = vxor.u32 %v554, 2147483648
    %v561 = vsel %vm559, %v553, %v560
    %vm562 = vcmp.eq.s32.totalorder %v557, 2
    %v563 = vxor.u32 %v553, 2147483648
    %v564 = vsel %vm562, %v563, %v554
    %v565 = vsel %vm558, %v561, %v564
    %v566 = vsel %vm555, nan, %v565
    %v567 = vand.u32 2147483647, %v353
    %vm568 = vcmp.le.f32.partialorder %v567, 0.7853982
    %vm569 = vcmp.lt.s32.totalorder %v353, 0
    %v570 = vand.u32 %v353, 2139095040
    %v571 = vshrl.u32 %v570, 23
    %v572 = vsub.s32 %v571, 127
    %v573 = vand.u32 2147483647, %v353
    %v574 = vand.u32 %v573, 8388607
    %v575 = vor.u32 %v574, 8388608
    %v576 = vsub.s32 0, %v575
    %v577 = vadd.s32 %v572, 1
    %vm578 = vcmp.gt.s32.totalorder %v577, 0
    %v579 = vsel %vm578, %v577, 0
    %v580 = vshrl.u32 %v579, 5
    %v581 = vand.u32 %v579, 31
    %v582 = vsub.s32 32, %v581
    %v583 = vshrl.u32 683565275, %v582
    %v584 = vshll.u32 683565275, %v581
    %v585 = vshrl.u32 2475754826, %v582
    %v586 = vor.u32 %v584, %v585
    %v587 = vshll.u32 2475754826, %v581
    %v588 = vshrl.u32 2131351028, %v582
    %v589 = vor.u32 %v587, %v588
    %v590 = vshll.u32 2131351028, %v581
    %v591 = vshrl.u32 2102212464, %v582
    %v592 = vor.u32 %v590, %v591
    %v593 = vshll.u32 2102212464, %v581
    %v594 = vshrl.u32 920167782, %v582
    %v595 = vor.u32 %v593, %v594
    %v596 = vshll.u32 920167782, %v581
    %v597 = vshrl.u32 1326507024, %v582
    %v598 = vor.u32 %v596, %v597
    %vm599 = vcmp.lt.s32.totalorder %v580, 1
    %vm600 = vcmp.lt.s32.totalorder %v580, 2
    %vm601 = vcmp.lt.s32.totalorder %v580, 3
    %vm602 = vcmp.lt.s32.totalorder %v580, 4
    %v603 = vsel %vm599, %v583, %v586
    %v604 = vsel %vm602, %v592, 2102212464
    %v605 = vsel %vm601, %v589, %v604
    %v606 = vsel %vm600, %v603, %v605
    %v607 = vsel %vm599, %v586, %v589
    %v608 = vsel %vm602, %v595, 920167782
    %v609 = vsel %vm601, %v592, %v608
    %v610 = vsel %vm600, %v607, %v609
    %v611 = vsel %vm599, %v589, %v592
    %v612 = vsel %vm602, %v598, 1326507024
    %v613 = vsel %vm601, %v595, %v612
    %v614 = vsel %vm600, %v611, %v613
    %v615 = vshll.u32 %v575, 8
    %v616 = vmul.u32.u64.compose %v615, %v614
    %v617 = vextract.low.u32 %v616
    %v618 = vextract.high.u32 %v616
    %v619 = vmul.u32.u64.compose %v615, %v610
    %v620 = vextract.low.u32 %v619
    %v621 = vextract.high.u32 %v619
    %v622 = vmul.u32 %v615, %v606
    %v623 = vadd.s32 %v618, %v620
    %vm624 = vc.u32 %v618, %v620
    %v625 = vadd.s32 %v621, 1
    %v626 = vsel %vm624, %v625, %v621
    %v627 = vadd.s32 %v622, %v626
    %v628 = vadd.s32 %v627, 536870912
    %v629 = vshrl.u32 %v628, 30
    %v630 = vshll.u32 %v629, 30
    %v631 = vsub.s32 %v627, %v630
    %vm632 = vcmp.lt.s32.totalorder %v631, 0
    %v633 = vsub.s32 0, %v631
    %v634 = vsel %vm632, %v633, %v631
    %v635 = vclz %v634
    %v636 = vsub.s32 %v635, 2
    %vm637 = vcmp.gt.s32.totalorder 0, %v636
    %v638 = vsel %vm637, 0, %v636
    %v639 = vsub.s32 32, %v638
    %v640 = vshll.u32 %v631, %v638
    %v641 = vshrl.u32 %v623, %v639
    %v642 = vor.u32 %v640, %v641
    %v643 = vsub.s32 4294967266, %v638
    %v644 = vadd.s32 %v643, 127
    %v645 = vshll.u32 %v644, 23
    %v646 = vor.u32 4788187, %v645
    %v647 = vand.u32 2147483647, %v646
    %v649 = vcvt.s32.f32 %v642
    %v650 = vmul.f32 %v649, %v647
    %v651 = vxor.u32 %v650, 2147483648
    %v652 = vsel %vm569, %v651, %v650
    %v653 = vsub.s32 4, %v629
    %v654 = vsel %vm569, %v653, %v629
    %v655 = vsel %vm568, %v353, %v652
    %v656 = vsel %vm568, 0, %v654
    %v657 = vcosq.f32.pop %v655
    %v658 = vsinq.f32.pop %v655
    %vm659 = vweird.f32 %v353
    %v660 = vadd.s32 %v656, 3
    %v661 = vand.u32 %v660, 3
    %vm662 = vcmp.lt.s32.totalorder %v661, 2
    %vm663 = vcmp.eq.s32.totalorder %v661, 0
    %v664 = vxor.u32 %v658, 2147483648
    %v665 = vsel %vm663, %v657, %v664
    %vm666 = vcmp.eq.s32.totalorder %v661, 2
    %v667 = vxor.u32 %v657, 2147483648
    %v668 = vsel %vm666, %v667, %v658
    %v669 = vsel %vm662, %v665, %v668
    %v670 = vsel %vm659, nan, %v669
    %v671 = vand.u32 2147483647, %v354
    %vm672 = vcmp.le.f32.partialorder %v671, 0.7853982
    %vm673 = vcmp.lt.s32.totalorder %v354, 0
    %v674 = vand.u32 %v354, 2139095040
    %v675 = vshrl.u32 %v674, 23
    %v676 = vsub.s32 %v675, 127
    %v677 = vand.u32 2147483647, %v354
    %v678 = vand.u32 %v677, 8388607
    %v679 = vor.u32 %v678, 8388608
    %v680 = vsub.s32 0, %v679
    %v681 = vadd.s32 %v676, 1
    %vm682 = vcmp.gt.s32.totalorder %v681, 0
    %v683 = vsel %vm682, %v681, 0
    %v684 = vshrl.u32 %v683, 5
    %v685 = vand.u32 %v683, 31
    %v686 = vsub.s32 32, %v685
    %v687 = vshrl.u32 683565275, %v686
    %v688 = vshll.u32 683565275, %v685
    %v689 = vshrl.u32 2475754826, %v686
    %v690 = vor.u32 %v688, %v689
    %v691 = vshll.u32 2475754826, %v685
    %v692 = vshrl.u32 2131351028, %v686
    %v693 = vor.u32 %v691, %v692
    %v694 = vshll.u32 2131351028, %v685
    %v695 = vshrl.u32 2102212464, %v686
    %v696 = vor.u32 %v694, %v695
    %v697 = vshll.u32 2102212464, %v685
    %v698 = vshrl.u32 920167782, %v686
    %v699 = vor.u32 %v697, %v698
    %v700 = vshll.u32 920167782, %v685
    %v701 = vshrl.u32 1326507024, %v686
    %v702 = vor.u32 %v700, %v701
    %vm703 = vcmp.lt.s32.totalorder %v684, 1
    %vm704 = vcmp.lt.s32.totalorder %v684, 2
    %vm705 = vcmp.lt.s32.totalorder %v684, 3
    %vm706 = vcmp.lt.s32.totalorder %v684, 4
    %v707 = vsel %vm703, %v687, %v690
    %v708 = vsel %vm706, %v696, 2102212464
    %v709 = vsel %vm705, %v693, %v708
    %v710 = vsel %vm704, %v707, %v709
    %v711 = vsel %vm703, %v690, %v693
    %v712 = vsel %vm706, %v699, 920167782
    %v713 = vsel %vm705, %v696, %v712
    %v714 = vsel %vm704, %v711, %v713
    %v715 = vsel %vm703, %v693, %v696
    %v716 = vsel %vm706, %v702, 1326507024
    %v717 = vsel %vm705, %v699, %v716
    %v718 = vsel %vm704, %v715, %v717
    %v719 = vshll.u32 %v679, 8
    %v720 = vmul.u32.u64.compose %v719, %v718
    %v721 = vextract.low.u32 %v720
    %v722 = vextract.high.u32 %v720
    %v723 = vmul.u32.u64.compose %v719, %v714
    %v724 = vextract.low.u32 %v723
    %v725 = vextract.high.u32 %v723
    %v726 = vmul.u32 %v719, %v710
    %v727 = vadd.s32 %v722, %v724
    %vm728 = vc.u32 %v722, %v724
    %v729 = vadd.s32 %v725, 1
    %v730 = vsel %vm728, %v729, %v725
    %v731 = vadd.s32 %v726, %v730
    %v732 = vadd.s32 %v731, 536870912
    %v733 = vshrl.u32 %v732, 30
    %v734 = vshll.u32 %v733, 30
    %v735 = vsub.s32 %v731, %v734
    %vm736 = vcmp.lt.s32.totalorder %v735, 0
    %v737 = vsub.s32 0, %v735
    %v738 = vsel %vm736, %v737, %v735
    %v739 = vclz %v738
    %v740 = vsub.s32 %v739, 2
    %vm741 = vcmp.gt.s32.totalorder 0, %v740
    %v742 = vsel %vm741, 0, %v740
    %v743 = vsub.s32 32, %v742
    %v744 = vshll.u32 %v735, %v742
    %v745 = vshrl.u32 %v727, %v743
    %v746 = vor.u32 %v744, %v745
    %v747 = vsub.s32 4294967266, %v742
    %v748 = vadd.s32 %v747, 127
    %v749 = vshll.u32 %v748, 23
    %v750 = vor.u32 4788187, %v749
    %v751 = vand.u32 2147483647, %v750
    %v753 = vcvt.s32.f32 %v746
    %v754 = vmul.f32 %v753, %v751
    %v755 = vxor.u32 %v754, 2147483648
    %v756 = vsel %vm673, %v755, %v754
    %v757 = vsub.s32 4, %v733
    %v758 = vsel %vm673, %v757, %v733
    %v759 = vsel %vm672, %v354, %v756
    %v760 = vsel %vm672, 0, %v758
    %v761 = vcosq.f32.pop %v759
    %v762 = vsinq.f32.pop %v759
    %vm763 = vweird.f32 %v354
    %v764 = vadd.s32 %v760, 3
    %v765 = vand.u32 %v764, 3
    %vm766 = vcmp.lt.s32.totalorder %v765, 2
    %vm767 = vcmp.eq.s32.totalorder %v765, 0
    %v768 = vxor.u32 %v762, 2147483648
    %v769 = vsel %vm767, %v761, %v768
    %vm770 = vcmp.eq.s32.totalorder %v765, 2
    %v771 = vxor.u32 %v761, 2147483648
    %v772 = vsel %vm770, %v771, %v762
    %v773 = vsel %vm766, %v769, %v772
    %v774 = vsel %vm763, nan, %v773
    %v775 = vand.u32 2147483647, %v355
    %vm776 = vcmp.le.f32.partialorder %v775, 0.7853982
    %vm777 = vcmp.lt.s32.totalorder %v355, 0
    %v778 = vand.u32 %v355, 2139095040
    %v779 = vshrl.u32 %v778, 23
    %v780 = vsub.s32 %v779, 127
    %v781 = vand.u32 2147483647, %v355
    %v782 = vand.u32 %v781, 8388607
    %v783 = vor.u32 %v782, 8388608
    %v784 = vsub.s32 0, %v783
    %v785 = vadd.s32 %v780, 1
    %vm786 = vcmp.gt.s32.totalorder %v785, 0
    %v787 = vsel %vm786, %v785, 0
    %v788 = vshrl.u32 %v787, 5
    %v789 = vand.u32 %v787, 31
    %v790 = vsub.s32 32, %v789
    %v791 = vshrl.u32 683565275, %v790
    %v792 = vshll.u32 683565275, %v789
    %v793 = vshrl.u32 2475754826, %v790
    %v794 = vor.u32 %v792, %v793
    %v795 = vshll.u32 2475754826, %v789
    %v796 = vshrl.u32 2131351028, %v790
    %v797 = vor.u32 %v795, %v796
    %v798 = vshll.u32 2131351028, %v789
    %v799 = vshrl.u32 2102212464, %v790
    %v800 = vor.u32 %v798, %v799
    %v801 = vshll.u32 2102212464, %v789
    %v802 = vshrl.u32 920167782, %v790
    %v803 = vor.u32 %v801, %v802
    %v804 = vshll.u32 920167782, %v789
    %v805 = vshrl.u32 1326507024, %v790
    %v806 = vor.u32 %v804, %v805
    %vm807 = vcmp.lt.s32.totalorder %v788, 1
    %vm808 = vcmp.lt.s32.totalorder %v788, 2
    %vm809 = vcmp.lt.s32.totalorder %v788, 3
    %vm810 = vcmp.lt.s32.totalorder %v788, 4
    %v811 = vsel %vm807, %v791, %v794
    %v812 = vsel %vm810, %v800, 2102212464
    %v813 = vsel %vm809, %v797, %v812
    %v814 = vsel %vm808, %v811, %v813
    %v815 = vsel %vm807, %v794, %v797
    %v816 = vsel %vm810, %v803, 920167782
    %v817 = vsel %vm809, %v800, %v816
    %v818 = vsel %vm808, %v815, %v817
    %v819 = vsel %vm807, %v797, %v800
    %v820 = vsel %vm810, %v806, 1326507024
    %v821 = vsel %vm809, %v803, %v820
    %v822 = vsel %vm808, %v819, %v821
    %v823 = vshll.u32 %v783, 8
    %v824 = vmul.u32.u64.compose %v823, %v822
    %v825 = vextract.low.u32 %v824
    %v826 = vextract.high.u32 %v824
    %v827 = vmul.u32.u64.compose %v823, %v818
    %v828 = vextract.low.u32 %v827
    %v829 = vextract.high.u32 %v827
    %v830 = vmul.u32 %v823, %v814
    %v831 = vadd.s32 %v826, %v828
    %vm832 = vc.u32 %v826, %v828
    %v833 = vadd.s32 %v829, 1
    %v834 = vsel %vm832, %v833, %v829
    %v835 = vadd.s32 %v830, %v834
    %v836 = vadd.s32 %v835, 536870912
    %v837 = vshrl.u32 %v836, 30
    %v838 = vshll.u32 %v837, 30
    %v839 = vsub.s32 %v835, %v838
    %vm840 = vcmp.lt.s32.totalorder %v839, 0
    %v841 = vsub.s32 0, %v839
    %v842 = vsel %vm840, %v841, %v839
    %v843 = vclz %v842
    %v844 = vsub.s32 %v843, 2
    %vm845 = vcmp.gt.s32.totalorder 0, %v844
    %v846 = vsel %vm845, 0, %v844
    %v847 = vsub.s32 32, %v846
    %v848 = vshll.u32 %v839, %v846
    %v849 = vshrl.u32 %v831, %v847
    %v850 = vor.u32 %v848, %v849
    %v851 = vsub.s32 4294967266, %v846
    %v852 = vadd.s32 %v851, 127
    %v853 = vshll.u32 %v852, 23
    %v854 = vor.u32 4788187, %v853
    %v855 = vand.u32 2147483647, %v854
    %v857 = vcvt.s32.f32 %v850
    %v858 = vmul.f32 %v857, %v855
    %v859 = vxor.u32 %v858, 2147483648
    %v860 = vsel %vm777, %v859, %v858
    %v861 = vsub.s32 4, %v837
    %v862 = vsel %vm777, %v861, %v837
    %v863 = vsel %vm776, %v355, %v860
    %v864 = vsel %vm776, 0, %v862
    %v865 = vcosq.f32.pop %v863
    %v866 = vsinq.f32.pop %v863
    %vm867 = vweird.f32 %v355
    %v868 = vadd.s32 %v864, 3
    %v869 = vand.u32 %v868, 3
    %vm870 = vcmp.lt.s32.totalorder %v869, 2
    %vm871 = vcmp.eq.s32.totalorder %v869, 0
    %v872 = vxor.u32 %v866, 2147483648
    %v873 = vsel %vm871, %v865, %v872
    %vm874 = vcmp.eq.s32.totalorder %v869, 2
    %v875 = vxor.u32 %v865, 2147483648
    %v876 = vsel %vm874, %v875, %v866
    %v877 = vsel %vm870, %v873, %v876
    %v878 = vsel %vm867, nan, %v877
    %v879 = vand.u32 2147483647, %v356
    %vm880 = vcmp.le.f32.partialorder %v879, 0.7853982
    %vm881 = vcmp.lt.s32.totalorder %v356, 0
    %v882 = vand.u32 %v356, 2139095040
    %v883 = vshrl.u32 %v882, 23
    %v884 = vsub.s32 %v883, 127
    %v885 = vand.u32 2147483647, %v356
    %v886 = vand.u32 %v885, 8388607
    %v887 = vor.u32 %v886, 8388608
    %v888 = vsub.s32 0, %v887
    %v889 = vadd.s32 %v884, 1
    %vm890 = vcmp.gt.s32.totalorder %v889, 0
    %v891 = vsel %vm890, %v889, 0
    %v892 = vshrl.u32 %v891, 5
    %v893 = vand.u32 %v891, 31
    %v894 = vsub.s32 32, %v893
    %v895 = vshrl.u32 683565275, %v894
    %v896 = vshll.u32 683565275, %v893
    %v897 = vshrl.u32 2475754826, %v894
    %v898 = vor.u32 %v896, %v897
    %v899 = vshll.u32 2475754826, %v893
    %v900 = vshrl.u32 2131351028, %v894
    %v901 = vor.u32 %v899, %v900
    %v902 = vshll.u32 2131351028, %v893
    %v903 = vshrl.u32 2102212464, %v894
    %v904 = vor.u32 %v902, %v903
    %v905 = vshll.u32 2102212464, %v893
    %v906 = vshrl.u32 920167782, %v894
    %v907 = vor.u32 %v905, %v906
    %v908 = vshll.u32 920167782, %v893
    %v909 = vshrl.u32 1326507024, %v894
    %v910 = vor.u32 %v908, %v909
    %vm911 = vcmp.lt.s32.totalorder %v892, 1
    %vm912 = vcmp.lt.s32.totalorder %v892, 2
    %vm913 = vcmp.lt.s32.totalorder %v892, 3
    %vm914 = vcmp.lt.s32.totalorder %v892, 4
    %v915 = vsel %vm911, %v895, %v898
    %v916 = vsel %vm914, %v904, 2102212464
    %v917 = vsel %vm913, %v901, %v916
    %v918 = vsel %vm912, %v915, %v917
    %v919 = vsel %vm911, %v898, %v901
    %v920 = vsel %vm914, %v907, 920167782
    %v921 = vsel %vm913, %v904, %v920
    %v922 = vsel %vm912, %v919, %v921
    %v923 = vsel %vm911, %v901, %v904
    %v924 = vsel %vm914, %v910, 1326507024
    %v925 = vsel %vm913, %v907, %v924
    %v926 = vsel %vm912, %v923, %v925
    %v927 = vshll.u32 %v887, 8
    %v928 = vmul.u32.u64.compose %v927, %v926
    %v929 = vextract.low.u32 %v928
    %v930 = vextract.high.u32 %v928
    %v931 = vmul.u32.u64.compose %v927, %v922
    %v932 = vextract.low.u32 %v931
    %v933 = vextract.high.u32 %v931
    %v934 = vmul.u32 %v927, %v918
    %v935 = vadd.s32 %v930, %v932
    %vm936 = vc.u32 %v930, %v932
    %v937 = vadd.s32 %v933, 1
    %v938 = vsel %vm936, %v937, %v933
    %v939 = vadd.s32 %v934, %v938
    %v940 = vadd.s32 %v939, 536870912
    %v941 = vshrl.u32 %v940, 30
    %v942 = vshll.u32 %v941, 30
    %v943 = vsub.s32 %v939, %v942
    %vm944 = vcmp.lt.s32.totalorder %v943, 0
    %v945 = vsub.s32 0, %v943
    %v946 = vsel %vm944, %v945, %v943
    %v947 = vclz %v946
    %v948 = vsub.s32 %v947, 2
    %vm949 = vcmp.gt.s32.totalorder 0, %v948
    %v950 = vsel %vm949, 0, %v948
    %v951 = vsub.s32 32, %v950
    %v952 = vshll.u32 %v943, %v950
    %v953 = vshrl.u32 %v935, %v951
    %v954 = vor.u32 %v952, %v953
    %v955 = vsub.s32 4294967266, %v950
    %v956 = vadd.s32 %v955, 127
    %v957 = vshll.u32 %v956, 23
    %v958 = vor.u32 4788187, %v957
    %v959 = vand.u32 2147483647, %v958
    %v961 = vcvt.s32.f32 %v954
    %v962 = vmul.f32 %v961, %v959
    %v963 = vxor.u32 %v962, 2147483648
    %v964 = vsel %vm881, %v963, %v962
    %v965 = vsub.s32 4, %v941
    %v966 = vsel %vm881, %v965, %v941
    %v967 = vsel %vm880, %v356, %v964
    %v968 = vsel %vm880, 0, %v966
    %v969 = vcosq.f32.pop %v967
    %v970 = vsinq.f32.pop %v967
    %vm971 = vweird.f32 %v356
    %v972 = vadd.s32 %v968, 3
    %v973 = vand.u32 %v972, 3
    %vm974 = vcmp.lt.s32.totalorder %v973, 2
    %vm975 = vcmp.eq.s32.totalorder %v973, 0
    %v976 = vxor.u32 %v970, 2147483648
    %v977 = vsel %vm975, %v969, %v976
    %vm978 = vcmp.eq.s32.totalorder %v973, 2
    %v979 = vxor.u32 %v969, 2147483648
    %v980 = vsel %vm978, %v979, %v970
    %v981 = vsel %vm974, %v977, %v980
    %v982 = vsel %vm971, nan, %v981
    %v983 = vand.u32 2147483647, %v357
    %vm984 = vcmp.le.f32.partialorder %v983, 0.7853982
    %vm985 = vcmp.lt.s32.totalorder %v357, 0
    %v986 = vand.u32 %v357, 2139095040
    %v987 = vshrl.u32 %v986, 23
    %v988 = vsub.s32 %v987, 127
    %v989 = vand.u32 2147483647, %v357
    %v990 = vand.u32 %v989, 8388607
    %v991 = vor.u32 %v990, 8388608
    %v992 = vsub.s32 0, %v991
    %v993 = vadd.s32 %v988, 1
    %vm994 = vcmp.gt.s32.totalorder %v993, 0
    %v995 = vsel %vm994, %v993, 0
    %v996 = vshrl.u32 %v995, 5
    %v997 = vand.u32 %v995, 31
    %v998 = vsub.s32 32, %v997
    %v999 = vshrl.u32 683565275, %v998
    %v1000 = vshll.u32 683565275, %v997
    %v1001 = vshrl.u32 2475754826, %v998
    %v1002 = vor.u32 %v1000, %v1001
    %v1003 = vshll.u32 2475754826, %v997
    %v1004 = vshrl.u32 2131351028, %v998
    %v1005 = vor.u32 %v1003, %v1004
    %v1006 = vshll.u32 2131351028, %v997
    %v1007 = vshrl.u32 2102212464, %v998
    %v1008 = vor.u32 %v1006, %v1007
    %v1009 = vshll.u32 2102212464, %v997
    %v1010 = vshrl.u32 920167782, %v998
    %v1011 = vor.u32 %v1009, %v1010
    %v1012 = vshll.u32 920167782, %v997
    %v1013 = vshrl.u32 1326507024, %v998
    %v1014 = vor.u32 %v1012, %v1013
    %vm1015 = vcmp.lt.s32.totalorder %v996, 1
    %vm1016 = vcmp.lt.s32.totalorder %v996, 2
    %vm1017 = vcmp.lt.s32.totalorder %v996, 3
    %vm1018 = vcmp.lt.s32.totalorder %v996, 4
    %v1019 = vsel %vm1015, %v999, %v1002
    %v1020 = vsel %vm1018, %v1008, 2102212464
    %v1021 = vsel %vm1017, %v1005, %v1020
    %v1022 = vsel %vm1016, %v1019, %v1021
    %v1023 = vsel %vm1015, %v1002, %v1005
    %v1024 = vsel %vm1018, %v1011, 920167782
    %v1025 = vsel %vm1017, %v1008, %v1024
    %v1026 = vsel %vm1016, %v1023, %v1025
    %v1027 = vsel %vm1015, %v1005, %v1008
    %v1028 = vsel %vm1018, %v1014, 1326507024
    %v1029 = vsel %vm1017, %v1011, %v1028
    %v1030 = vsel %vm1016, %v1027, %v1029
    %v1031 = vshll.u32 %v991, 8
    %v1032 = vmul.u32.u64.compose %v1031, %v1030
    %v1033 = vextract.low.u32 %v1032
    %v1034 = vextract.high.u32 %v1032
    %v1035 = vmul.u32.u64.compose %v1031, %v1026
    %v1036 = vextract.low.u32 %v1035
    %v1037 = vextract.high.u32 %v1035
    %v1038 = vmul.u32 %v1031, %v1022
    %v1039 = vadd.s32 %v1034, %v1036
    %vm1040 = vc.u32 %v1034, %v1036
    %v1041 = vadd.s32 %v1037, 1
    %v1042 = vsel %vm1040, %v1041, %v1037
    %v1043 = vadd.s32 %v1038, %v1042
    %v1044 = vadd.s32 %v1043, 536870912
    %v1045 = vshrl.u32 %v1044, 30
    %v1046 = vshll.u32 %v1045, 30
    %v1047 = vsub.s32 %v1043, %v1046
    %vm1048 = vcmp.lt.s32.totalorder %v1047, 0
    %v1049 = vsub.s32 0, %v1047
    %v1050 = vsel %vm1048, %v1049, %v1047
    %v1051 = vclz %v1050
    %v1052 = vsub.s32 %v1051, 2
    %vm1053 = vcmp.gt.s32.totalorder 0, %v1052
    %v1054 = vsel %vm1053, 0, %v1052
    %v1055 = vsub.s32 32, %v1054
    %v1056 = vshll.u32 %v1047, %v1054
    %v1057 = vshrl.u32 %v1039, %v1055
    %v1058 = vor.u32 %v1056, %v1057
    %v1059 = vsub.s32 4294967266, %v1054
    %v1060 = vadd.s32 %v1059, 127
    %v1061 = vshll.u32 %v1060, 23
    %v1062 = vor.u32 4788187, %v1061
    %v1063 = vand.u32 2147483647, %v1062
    %v1065 = vcvt.s32.f32 %v1058
    %v1066 = vmul.f32 %v1065, %v1063
    %v1067 = vxor.u32 %v1066, 2147483648
    %v1068 = vsel %vm985, %v1067, %v1066
    %v1069 = vsub.s32 4, %v1045
    %v1070 = vsel %vm985, %v1069, %v1045
    %v1071 = vsel %vm984, %v357, %v1068
    %v1072 = vsel %vm984, 0, %v1070
    %v1073 = vcosq.f32.pop %v1071
    %v1074 = vsinq.f32.pop %v1071
    %vm1075 = vweird.f32 %v357
    %v1076 = vadd.s32 %v1072, 3
    %v1077 = vand.u32 %v1076, 3
    %vm1078 = vcmp.lt.s32.totalorder %v1077, 2
    %vm1079 = vcmp.eq.s32.totalorder %v1077, 0
    %v1080 = vxor.u32 %v1074, 2147483648
    %v1081 = vsel %vm1079, %v1073, %v1080
    %vm1082 = vcmp.eq.s32.totalorder %v1077, 2
    %v1083 = vxor.u32 %v1073, 2147483648
    %v1084 = vsel %vm1082, %v1083, %v1074
    %v1085 = vsel %vm1078, %v1081, %v1084
    %v1086 = vsel %vm1075, nan, %v1085
    %v1087 = vand.u32 2147483647, %v358
    %vm1088 = vcmp.le.f32.partialorder %v1087, 0.7853982
    %vm1089 = vcmp.lt.s32.totalorder %v358, 0
    %v1090 = vand.u32 %v358, 2139095040
    %v1091 = vshrl.u32 %v1090, 23
    %v1092 = vsub.s32 %v1091, 127
    %v1093 = vand.u32 2147483647, %v358
    %v1094 = vand.u32 %v1093, 8388607
    %v1095 = vor.u32 %v1094, 8388608
    %v1096 = vsub.s32 0, %v1095
    %v1097 = vadd.s32 %v1092, 1
    %vm1098 = vcmp.gt.s32.totalorder %v1097, 0
    %v1099 = vsel %vm1098, %v1097, 0
    %v1100 = vshrl.u32 %v1099, 5
    %v1101 = vand.u32 %v1099, 31
    %v1102 = vsub.s32 32, %v1101
    %v1103 = vshrl.u32 683565275, %v1102
    %v1104 = vshll.u32 683565275, %v1101
    %v1105 = vshrl.u32 2475754826, %v1102
    %v1106 = vor.u32 %v1104, %v1105
    %v1107 = vshll.u32 2475754826, %v1101
    %v1108 = vshrl.u32 2131351028, %v1102
    %v1109 = vor.u32 %v1107, %v1108
    %v1110 = vshll.u32 2131351028, %v1101
    %v1111 = vshrl.u32 2102212464, %v1102
    %v1112 = vor.u32 %v1110, %v1111
    %v1113 = vshll.u32 2102212464, %v1101
    %v1114 = vshrl.u32 920167782, %v1102
    %v1115 = vor.u32 %v1113, %v1114
    %v1116 = vshll.u32 920167782, %v1101
    %v1117 = vshrl.u32 1326507024, %v1102
    %v1118 = vor.u32 %v1116, %v1117
    %vm1119 = vcmp.lt.s32.totalorder %v1100, 1
    %vm1120 = vcmp.lt.s32.totalorder %v1100, 2
    %vm1121 = vcmp.lt.s32.totalorder %v1100, 3
    %vm1122 = vcmp.lt.s32.totalorder %v1100, 4
    %v1123 = vsel %vm1119, %v1103, %v1106
    %v1124 = vsel %vm1122, %v1112, 2102212464
    %v1125 = vsel %vm1121, %v1109, %v1124
    %v1126 = vsel %vm1120, %v1123, %v1125
    %v1127 = vsel %vm1119, %v1106, %v1109
    %v1128 = vsel %vm1122, %v1115, 920167782
    %v1129 = vsel %vm1121, %v1112, %v1128
    %v1130 = vsel %vm1120, %v1127, %v1129
    %v1131 = vsel %vm1119, %v1109, %v1112
    %v1132 = vsel %vm1122, %v1118, 1326507024
    %v1133 = vsel %vm1121, %v1115, %v1132
    %v1134 = vsel %vm1120, %v1131, %v1133
    %v1135 = vshll.u32 %v1095, 8
    %v1136 = vmul.u32.u64.compose %v1135, %v1134
    %v1137 = vextract.low.u32 %v1136
    %v1138 = vextract.high.u32 %v1136
    %v1139 = vmul.u32.u64.compose %v1135, %v1130
    %v1140 = vextract.low.u32 %v1139
    %v1141 = vextract.high.u32 %v1139
    %v1142 = vmul.u32 %v1135, %v1126
    %v1143 = vadd.s32 %v1138, %v1140
    %vm1144 = vc.u32 %v1138, %v1140
    %v1145 = vadd.s32 %v1141, 1
    %v1146 = vsel %vm1144, %v1145, %v1141
    %v1147 = vadd.s32 %v1142, %v1146
    %v1148 = vadd.s32 %v1147, 536870912
    %v1149 = vshrl.u32 %v1148, 30
    %v1150 = vshll.u32 %v1149, 30
    %v1151 = vsub.s32 %v1147, %v1150
    %vm1152 = vcmp.lt.s32.totalorder %v1151, 0
    %v1153 = vsub.s32 0, %v1151
    %v1154 = vsel %vm1152, %v1153, %v1151
    %v1155 = vclz %v1154
    %v1156 = vsub.s32 %v1155, 2
    %vm1157 = vcmp.gt.s32.totalorder 0, %v1156
    %v1158 = vsel %vm1157, 0, %v1156
    %v1159 = vsub.s32 32, %v1158
    %v1160 = vshll.u32 %v1151, %v1158
    %v1161 = vshrl.u32 %v1143, %v1159
    %v1162 = vor.u32 %v1160, %v1161
    %v1163 = vsub.s32 4294967266, %v1158
    %v1164 = vadd.s32 %v1163, 127
    %v1165 = vshll.u32 %v1164, 23
    %v1166 = vor.u32 4788187, %v1165
    %v1167 = vand.u32 2147483647, %v1166
    %v1169 = vcvt.s32.f32 %v1162
    %v1170 = vmul.f32 %v1169, %v1167
    %v1171 = vxor.u32 %v1170, 2147483648
    %v1172 = vsel %vm1089, %v1171, %v1170
    %v1173 = vsub.s32 4, %v1149
    %v1174 = vsel %vm1089, %v1173, %v1149
    %v1175 = vsel %vm1088, %v358, %v1172
    %v1176 = vsel %vm1088, 0, %v1174
    %v1177 = vcosq.f32.pop %v1175
    %v1178 = vsinq.f32.pop %v1175
    %vm1179 = vweird.f32 %v358
    %v1180 = vadd.s32 %v1176, 3
    %v1181 = vand.u32 %v1180, 3
    %vm1182 = vcmp.lt.s32.totalorder %v1181, 2
    %vm1183 = vcmp.eq.s32.totalorder %v1181, 0
    %v1184 = vxor.u32 %v1178, 2147483648
    %v1185 = vsel %vm1183, %v1177, %v1184
    %vm1186 = vcmp.eq.s32.totalorder %v1181, 2
    %v1187 = vxor.u32 %v1177, 2147483648
    %v1188 = vsel %vm1186, %v1187, %v1178
    %v1189 = vsel %vm1182, %v1185, %v1188
    %v1190 = vsel %vm1179, nan, %v1189
    %v1191 = vadd.f32 %v133, %v462
    %v1192 = vadd.f32 %v138, %v566
    %v1193 = vadd.f32 %v143, %v670
    %v1194 = vadd.f32 %v148, %v774
    %v1195 = vadd.f32 %v153, %v878
    %v1196 = vadd.f32 %v158, %v982
    %v1197 = vadd.f32 %v163, %v1086
    %v1198 = vadd.f32 %v168, %v1190
    %1199 = vst [vmem:[#allocation2] sm:$0xff] %v1191
    %1200 = vst [vmem:[#allocation2 + $0x8] sm:$0xff] %v1192
    %1201 = vst [vmem:[#allocation2 + $0x10] sm:$0xff] %v1193
    %1202 = vst [vmem:[#allocation2 + $0x18] sm:$0xff] %v1194
    %1203 = vst [vmem:[#allocation2 + $0x20] sm:$0xff] %v1195
    %1204 = vst [vmem:[#allocation2 + $0x28] sm:$0xff] %v1196
    %1205 = vst [vmem:[#allocation2 + $0x30] sm:$0xff] %v1197
    %1206 = vst [vmem:[#allocation2 + $0x38] sm:$0xff] %v1198
    // Predicated region
    $region26: #{tpu_custom_call.1} parent=1 // pred_check
      _
    $region27: #{tpu_custom_call.1} parent=1 // pred_check_branch
      %1208 = sbr.rel (0) target = $region29
    $region28: #{tpu_custom_call.1} parent=1 // pred_region
      %s1210 = ssub.s32 1024, 1024
      %1211 = vsyncadd [#allocation3], %s1210
      %s1212 = sshll.u32 [#allocation2], 4
      %s1213 = int_to_ptr.vmem [resolvable:$true] %s1212
      %1218 = dma.vmem_to_hbm [thread:$0]  %s1213, 1024, %s6, [#allocation3], 128, 128, 8
    $region29: #{tpu_custom_call.1} parent=1 // pred_fallthru
      _
    // Predicated region
    $region30: #{tpu_custom_call.1} parent=1 // pred_check
      _
    $region31: #{tpu_custom_call.1} parent=1 // pred_check_branch
      %1220 = sbr.rel (0) target = $region33
    $region32: #{tpu_custom_call.1} parent=1 // pred_region
      %1221 = dma.done [#allocation3], 1024
    $region33: #{tpu_custom_call.1} parent=1 // pred_fallthru
      _
    %1222 = vsyncpa [#allocation3], 1

</llo_original>
